<compile_context>
chip_gen: v7x
topology: tpu7x:2x2x1
jax: 0.10.0
libtpu: 0.0.40
codegen_flags: <defaults>
</compile_context>

<pallas_src>
import functools

import jax
import jax.numpy as jnp
from jax.experimental import pallas as pl
from jax.experimental.pallas import tpu as pltpu


def _round_up(x, m):
    return (x + m - 1) // m * m


def _vmem_capacity_bytes():
    """Best-effort physical VMEM capacity; conservative (v7x) fallback."""
    try:
        info = pltpu.get_tpu_info()
        cap = getattr(info, "vmem_capacity_bytes", None)
        if cap:
            return int(cap)
    except Exception:
        pass
    return 64 * 1024 * 1024


def _single_buffered_spec(shape, index_map):
    # Grid-invariant operand: request single buffering to halve its VMEM cost.
    try:
        return pl.BlockSpec(shape, index_map, pipeline_mode=pl.Buffered(1))
    except Exception:  # older jax without pipeline_mode: fall back to default
        return pl.BlockSpec(shape, index_map)


def mlp_encoder_kernel(x_ref, w1_ref, b1_ref, w2_ref, b2_ref, o_ref, h_ref):
    # x_ref:  (tile_b, K_pad)   bf16      w1_ref: (K_pad, H_pad) bf16
    # b1_ref: (1, H_pad)        f32       w2_ref: (H_pad, tile_n) bf16
    # b2_ref: (1, tile_n)       f32       o_ref:  (tile_b, tile_n) out dtype
    # h_ref (scratch): (tile_b, H_pad) bf16
    j = pl.program_id(1)

    # First GEMM + bias + ReLU only once per batch tile (j is the innermost,
    # sequentially swept axis -> scratch persists across N panels).
    @pl.when(j == 0)
    def _():
        h = jnp.dot(x_ref[...], w1_ref[...], preferred_element_type=jnp.float32)
        h = jnp.maximum(h + b1_ref[...], 0.0)
        h_ref[...] = h.astype(h_ref.dtype)

    # Second GEMM over this output-N panel; bias added on the f32 accumulator.
    y = jnp.dot(h_ref[...], w2_ref[...], preferred_element_type=jnp.float32)
    o_ref[...] = (y + b2_ref[...]).astype(o_ref.dtype)


def mlp_encoder(x, w1, b1, w2, b2, *, tile_b=512, tile_n=256,
                compute_dtype=jnp.bfloat16):
    """y = relu(x @ w1 + b1) @ w2 + b2.

    x:  (B, in_features)
    w1: (in_features, hidden)   b1: (hidden,) or (1, hidden)
    w2: (hidden, hidden)        b2: (hidden,) or (1, hidden)
    """
    B, K = x.shape
    Kw, H = w1.shape
    assert Kw == K and w2.shape == (H, H)
    out_dtype = x.dtype
    out_isz = jnp.dtype(out_dtype).itemsize
    cds = jnp.dtype(compute_dtype).itemsize

    # ---- Tiling / padding decisions (all static, outside the kernel) ----
    K_pad = _round_up(max(K, 128), 128)       # full MXU contraction depth
    H_pad = _round_up(H, 128)                 # lane-dense hidden/output width

    # N-panel width must divide H_pad (avoid over-padding H with zero columns).
    tile_n = _round_up(min(tile_n, H_pad), 128)
    if H_pad % tile_n != 0:
        tile_n = 128

    # Batch tile: multiple of 8; keep >= 2 batch tiles for megacore when possible.
    tile_b = max(8, _round_up(min(tile_b, _round_up(B, 8)), 8))
    B_pad = _round_up(B, tile_b)
    if B_pad // tile_b < 2 and tile_b >= 16:
        tile_b = _round_up(tile_b // 2, 8)
        B_pad = _round_up(B, tile_b)

    vmem_cap = _vmem_capacity_bytes()
    budget = int(0.8 * vmem_cap)

    def base_bytes(tb):
        return (2 * tb * K_pad * cds          # x tile (double-buffered)
                + K_pad * H_pad * cds         # W1 resident (single-buffered)
                + H_pad * 4                   # b1 resident
                + tb * H_pad * cds)           # h scratch

    # Shrink tile_b if the W1-resident footprint would blow VMEM (very large K/H).
    while base_bytes(tile_b) > budget and tile_b > 8:
        tile_b = max(8, _round_up(tile_b // 2, 8))
        B_pad = _round_up(B, tile_b)
    # TODO(synk): for K_pad*H_pad too large to keep W1 resident (v7x, huge K),
    # a 3-D grid streaming W1 hidden-panels would be needed; not implemented.

    resident_w2_bytes = (H_pad * H_pad * cds + H_pad * 4
                         + 2 * tile_b * H_pad * out_isz)
    streamed_w2_bytes = 2 * (H_pad * tile_n * cds + tile_n * 4
                             + tile_b * tile_n * out_isz)
    w2_resident = base_bytes(tile_b) + resident_w2_bytes <= budget
    if w2_resident:
        tile_n = H_pad                        # single N panel, W2 read once total
        needed = base_bytes(tile_b) + resident_w2_bytes
    else:
        needed = base_bytes(tile_b) + streamed_w2_bytes

    vmem_limit = max(32 * 1024 * 1024,
                     min(int(0.9 * vmem_cap), needed + (16 << 20)))
    vmem_limit = min(vmem_limit, 100 * 1024 * 1024)

    # ---- One-time padding + casts (MXU operands -> bf16, biases stay f32) ----
    xp = jnp.pad(x, ((0, B_pad - B), (0, K_pad - K))).astype(compute_dtype)
    w1p = jnp.pad(w1, ((0, K_pad - K), (0, H_pad - H))).astype(compute_dtype)
    w2p = jnp.pad(w2, ((0, H_pad - H), (0, H_pad - H))).astype(compute_dtype)
    b1p = jnp.pad(jnp.reshape(b1, (1, -1)).astype(jnp.float32),
                  ((0, 0), (0, H_pad - H)))
    b2p = jnp.pad(jnp.reshape(b2, (1, -1)).astype(jnp.float32),
                  ((0, 0), (0, H_pad - H)))

    n_batch_tiles = B_pad // tile_b
    grid = (n_batch_tiles, H_pad // tile_n)

    flops = 2 * B_pad * H_pad * (K_pad + H_pad)
    w2_reads = 1 if w2_resident else n_batch_tiles
    bytes_accessed = (xp.size * cds + w1p.size * cds + b1p.size * 4
                      + w2_reads * (w2p.size * cds + b2p.size * 4)
                      + B_pad * H_pad * out_isz)

    # W2 / b2 specs: single-buffered when fully resident (grid-invariant index),
    # default double-buffered pipeline when streamed as N panels.
    if w2_resident:
        w2_spec = _single_buffered_spec((H_pad, tile_n), lambda i, j: (0, j))
        b2_spec = _single_buffered_spec((1, tile_n), lambda i, j: (0, j))
    else:
        w2_spec = pl.BlockSpec((H_pad, tile_n), lambda i, j: (0, j))
        b2_spec = pl.BlockSpec((1, tile_n), lambda i, j: (0, j))

    out = pl.pallas_call(
        mlp_encoder_kernel,
        out_shape=jax.ShapeDtypeStruct((B_pad, H_pad), out_dtype),
        grid_spec=pltpu.PrefetchScalarGridSpec(
            num_scalar_prefetch=0,
            grid=grid,
            in_specs=[
                pl.BlockSpec((tile_b, K_pad), lambda i, j: (i, 0)),        # x tile
                _single_buffered_spec((K_pad, H_pad), lambda i, j: (0, 0)),  # W1
                _single_buffered_spec((1, H_pad), lambda i, j: (0, 0)),      # b1
                w2_spec,                                                    # W2
                b2_spec,                                                    # b2
            ],
            out_specs=pl.BlockSpec((tile_b, tile_n), lambda i, j: (i, j)),
            scratch_shapes=[pltpu.VMEM((tile_b, H_pad), compute_dtype)],   # h
        ),
        # NOTE: the j axis must stay "arbitrary" — the pl.when(j==0) h-compute
        # relies on a full sequential j sweep per core.  Only i is "parallel".
        compiler_params=pltpu.CompilerParams(
            dimension_semantics=("parallel", "arbitrary"),
            vmem_limit_bytes=vmem_limit,
        ),
        cost_estimate=pl.CostEstimate(
            flops=flops, transcendentals=0, bytes_accessed=bytes_accessed
        ),
    )(xp, w1p, b1p, w2p, b2p)

    return out[:B, :H]


def init_params(key, in_features, hidden_dim, dtype=jnp.float32):
    # PyTorch nn.Linear default init: U(-1/sqrt(fan_in), 1/sqrt(fan_in)).
    k1, k2, k3, k4 = jax.random.split(key, 4)
    bound1 = 1.0 / (in_features ** 0.5)
    bound2 = 1.0 / (hidden_dim ** 0.5)
    w1 = jax.random.uniform(k1, (in_features, hidden_dim), dtype, -bound1, bound1)
    b1 = jax.random.uniform(k2, (1, hidden_dim), dtype, -bound1, bound1)
    w2 = jax.random.uniform(k3, (hidden_dim, hidden_dim), dtype, -bound2, bound2)
    b2 = jax.random.uniform(k4, (1, hidden_dim), dtype, -bound2, bound2)
    return w1, b1, w2, b2


if __name__ == "__main__":
    key = jax.random.PRNGKey(0)
    k_x, k_p = jax.random.split(key)

    # Small, module-consistent test shapes (wrapper pads K->128; hidden=256 is
    # already lane-dense).  Realistic runs use hidden_dim=1024, batch >= 512.
    batch = 16
    in_features = 32
    hidden_dim = 256

    x = jax.random.normal(k_x, (batch, in_features), dtype=jnp.float32)
    w1, b1, w2, b2 = init_params(k_p, in_features, hidden_dim)

    fn = jax.jit(functools.partial(mlp_encoder, tile_b=512, tile_n=256))
    out = jax.block_until_ready(fn(x, w1, b1, w2, b2))

    assert out.shape == (batch, hidden_dim)
    assert out.dtype == x.dtype

    # Reference matched to the kernel's MXU path (bf16 operands, f32 accum).
    xb, w1b, w2b = (a.astype(jnp.bfloat16) for a in (x, w1, w2))
    h_ref = jnp.maximum(
        jnp.dot(xb, w1b, preferred_element_type=jnp.float32) + b1, 0.0)
    ref_bf16 = jnp.dot(h_ref.astype(jnp.bfloat16), w2b,
                       preferred_element_type=jnp.float32) + b2
    # Pure-f32 reference (module semantics) with bf16-appropriate tolerance.
    ref_f32 = jnp.maximum(x @ w1 + b1, 0.0) @ w2 + b2

    assert jnp.allclose(out, ref_bf16, atol=5e-3, rtol=5e-3), (
        float(jnp.max(jnp.abs(out - ref_bf16))))
    assert jnp.allclose(out, ref_f32, atol=5e-2, rtol=5e-2), (
        float(jnp.max(jnp.abs(out - ref_f32))))

    print("KERNEL_OK")
</pallas_src>

<mosaic_0001>
module attributes {stable_mosaic.version = 11 : i64} {
  func.func @mlp_encoder_kernel(%arg0: i32, %arg1: i32, %arg2: memref<8x128xbf16, #tpu.memory_space<vmem>>, %arg3: memref<128x256xbf16, #tpu.memory_space<vmem>>, %arg4: memref<1x256xf32, #tpu.memory_space<vmem>>, %arg5: memref<256x256xbf16, #tpu.memory_space<vmem>>, %arg6: memref<1x256xf32, #tpu.memory_space<vmem>>, %arg7: memref<8x256xf32, #tpu.memory_space<vmem>>, %arg8: memref<8x256xbf16, #tpu.memory_space<vmem>>) attributes {dimension_semantics = [#tpu.dimension_semantics<parallel>, #tpu.dimension_semantics<arbitrary>], iteration_bounds = array<i64: 2, 1>, scalar_prefetch = 0 : i64, scratch_operands = 1 : i64, tpu.core_type = #tpu.core_type<tc>, window_params = [{transform_indices = @transform_0, window_bounds = array<i64: 8, 128>}, {pipeline_mode = #tpu.pipeline_mode<synchronous>, transform_indices = @transform_1, window_bounds = array<i64: 128, 256>}, {pipeline_mode = #tpu.pipeline_mode<synchronous>, transform_indices = @transform_2, window_bounds = array<i64: 1, 256>}, {pipeline_mode = #tpu.pipeline_mode<synchronous>, transform_indices = @transform_3, window_bounds = array<i64: 256, 256>}, {pipeline_mode = #tpu.pipeline_mode<synchronous>, transform_indices = @transform_4, window_bounds = array<i64: 1, 256>}, {transform_indices = @transform_5, window_bounds = array<i64: 8, 256>}]} {
    %c0_i32 = arith.constant 0 : i32
    %0 = arith.cmpi eq, %arg1, %c0_i32 : i32
    %1 = arith.extui %0 : i1 to i32
    %c0_i32_0 = arith.constant 0 : i32
    %2 = arith.cmpi ne, %1, %c0_i32_0 : i32
    scf.if %2 {
      %c0_8 = arith.constant 0 : index
      %c0_9 = arith.constant 0 : index
      %10 = vector.load %arg2[%c0_8, %c0_9] : memref<8x128xbf16, #tpu.memory_space<vmem>>, vector<8x128xbf16>
      %c0_10 = arith.constant 0 : index
      %c0_11 = arith.constant 0 : index
      %11 = vector.load %arg3[%c0_10, %c0_11] : memref<128x256xbf16, #tpu.memory_space<vmem>>, vector<128x256xbf16>
      %cst_12 = arith.constant dense<0.000000e+00> : vector<8x256xf32>
      %12 = tpu.matmul %10, %11, %cst_12 {dimension_numbers = #tpu.dot_dimension_numbers<[1], [0], [0], [1], [0, 0, 1, 1], [], []>} : vector<8x128xbf16>, vector<128x256xbf16>, vector<8x256xf32> -> vector<8x256xf32>
      %c0_13 = arith.constant 0 : index
      %c0_14 = arith.constant 0 : index
      %13 = vector.load %arg4[%c0_13, %c0_14] : memref<1x256xf32, #tpu.memory_space<vmem>>, vector<1x256xf32>
      %14 = vector.broadcast %13 : vector<1x256xf32> to vector<8x256xf32>
      %15 = arith.addf %12, %14 : vector<8x256xf32>
      %cst_15 = arith.constant 0.000000e+00 : f32
      %16 = vector.broadcast %cst_15 : f32 to vector<8x256xf32>
      %17 = arith.maximumf %15, %16 : vector<8x256xf32>
      %18 = arith.truncf %17 : vector<8x256xf32> to vector<8x256xbf16>
      %c0_16 = arith.constant 0 : index
      %c0_17 = arith.constant 0 : index
      %19 = vector.load %arg8[%c0_16, %c0_17] : memref<8x256xbf16, #tpu.memory_space<vmem>>, vector<8x256xbf16>
      tpu.vector_store %arg8[%c0_16, %c0_17], %18 {strides = array<i32>} : memref<8x256xbf16, #tpu.memory_space<vmem>>, vector<8x256xbf16>,
    } else {
    }
    %c0 = arith.constant 0 : index
    %c0_1 = arith.constant 0 : index
    %3 = vector.load %arg8[%c0, %c0_1] : memref<8x256xbf16, #tpu.memory_space<vmem>>, vector<8x256xbf16>
    %c0_2 = arith.constant 0 : index
    %c0_3 = arith.constant 0 : index
    %4 = vector.load %arg5[%c0_2, %c0_3] : memref<256x256xbf16, #tpu.memory_space<vmem>>, vector<256x256xbf16>
    %cst = arith.constant dense<0.000000e+00> : vector<8x256xf32>
    %5 = tpu.matmul %3, %4, %cst {dimension_numbers = #tpu.dot_dimension_numbers<[1], [0], [0], [1], [0, 0, 1, 1], [], []>} : vector<8x256xbf16>, vector<256x256xbf16>, vector<8x256xf32> -> vector<8x256xf32>
    %c0_4 = arith.constant 0 : index
    %c0_5 = arith.constant 0 : index
    %6 = vector.load %arg6[%c0_4, %c0_5] : memref<1x256xf32, #tpu.memory_space<vmem>>, vector<1x256xf32>
    %7 = vector.broadcast %6 : vector<1x256xf32> to vector<8x256xf32>
    %8 = arith.addf %5, %7 : vector<8x256xf32>
    %c0_6 = arith.constant 0 : index
    %c0_7 = arith.constant 0 : index
    %9 = vector.load %arg7[%c0_6, %c0_7] : memref<8x256xf32, #tpu.memory_space<vmem>>, vector<8x256xf32>
    tpu.vector_store %arg7[%c0_6, %c0_7], %8 {strides = array<i32>} : memref<8x256xf32, #tpu.memory_space<vmem>>, vector<8x256xf32>,
    return
  }
  func.func @transform_0(%arg0: i32, %arg1: i32) -> (i32, i32) {
    %c0_i32 = arith.constant 0 : i32
    %c0_i32_0 = arith.constant 0 : i32
    return %arg0, %c0_i32 : i32, i32
  }
  func.func @transform_1(%arg0: i32, %arg1: i32) -> (i32, i32) {
    %c0_i32 = arith.constant 0 : i32
    %c0_i32_0 = arith.constant 0 : i32
    %c0_i32_1 = arith.constant 0 : i32
    return %c0_i32, %c0_i32_0 : i32, i32
  }
  func.func @transform_2(%arg0: i32, %arg1: i32) -> (i32, i32) {
    %c0_i32 = arith.constant 0 : i32
    %c0_i32_0 = arith.constant 0 : i32
    %c0_i32_1 = arith.constant 0 : i32
    return %c0_i32, %c0_i32_0 : i32, i32
  }
  func.func @transform_3(%arg0: i32, %arg1: i32) -> (i32, i32) {
    %c0_i32 = arith.constant 0 : i32
    %c0_i32_0 = arith.constant 0 : i32
    return %c0_i32, %arg1 : i32, i32
  }
  func.func @transform_4(%arg0: i32, %arg1: i32) -> (i32, i32) {
    %c0_i32 = arith.constant 0 : i32
    %c0_i32_0 = arith.constant 0 : i32
    return %c0_i32, %arg1 : i32, i32
  }
  func.func @transform_5(%arg0: i32, %arg1: i32) -> (i32, i32) {
    %c0_i32 = arith.constant 0 : i32
    return %arg0, %arg1 : i32, i32
  }
}

</mosaic_0001>

<llo_original>
// kernel: mlp_encoder.1
$region0: #{mlp_encoder.1}
  #allocation0 [shape = 'u32[]', space=smem, size = 0x4, offset = 0x4, fixed_abs, tag = 'smem constant byte address 0x4 - core index']
  #allocation1 [shape = 'u32[144,128]{1,0:T(1,128)}', space=vmem, size = 0x12000, scoped, tag = 'internal scratch']
  #allocation2 [shape = 'bf16[8,256]{1,0:T(8,128)(2,1)}', space=vmem, size = 0x1000, scoped, tag = 'scratch operand']
  %s0 = inlined_call_operand.vmem [shape: bf16[16,128], index: 0, kind: input, shape index: {}]
  %s1 = inlined_call_operand.vmem [shape: bf16[128,256], index: 1, kind: input, shape index: {}]
  %s2 = inlined_call_operand.vmem [shape: f32[1,256], index: 2, kind: input, shape index: {}]
  %s3 = inlined_call_operand.vmem [shape: bf16[256,256], index: 3, kind: input, shape index: {}]
  %s4 = inlined_call_operand.vmem [shape: f32[1,256], index: 4, kind: input, shape index: {}]
  %s5 = inlined_call_operand.hbm [shape: f32[16,256], index: 5, kind: output, shape index: {}]
  %s6 = sld [smem:[#allocation0]]
  $region57: #{mlp_encoder.1} parent=0
    _
  %s8 = ssub.s32 1, %s6
  %s9 = scalar_select 0, %s8, %s6
  $region1: #{mlp_encoder.1} parent=0
    #allocation3 [shape = 'u8[16384]{0}', space=vmem, size = 0x4000, scoped, tag = 'output window, operand 0']
    #allocation4 [shape = 's32[2]{0}', space=sflag, size = 0x8, scoped, tag = 'scoped memory for mlp_encoder.1']
    %10 = vsyncpa [#allocation4], 0
    %s11 = scalar_lea.sflag [#allocation4], 1
    %12 = vsyncpa %s11, 0
    loop: start=0, step=1, limit=4
    $region2: #{mlp_encoder.1} parent=1 // loop_pre_header
      _
    $region3: #{mlp_encoder.1} parent=1 // loop_header
      %s14 = sphi 0, %s18
      %p15 = scmp.ge.s32.totalorder %s14, 4
      %s21 = sphi 0, %s33
      %s22 = sphi 0, %s29
      %s23 = sphi 0, %s21
      %s24 = sphi 0, %s22
      %s25 = sphi 0, %s23
      %s26 = sphi 0, %s24
      %s36 = sphi 0, %s38
      %s39 = sphi 0, %s36
      %s40 = sphi 0, %s39
      %s56 = sphi 0, %s40
      %s60 = sphi 0, %s60
      %s62 = sphi 0, %s60
      %s63 = sphi 0, %s62
      %s77 = sphi 0, %s63
      %s81 = sphi 0, %s81
      %s83 = sphi 0, %s81
      %s84 = sphi 0, %s83
      %s98 = sphi 0, %s84
      %s104 = sphi 0, %s106
      %s107 = sphi 0, %s104
      %s108 = sphi 0, %s107
      %s124 = sphi 0, %s108
      %s130 = sphi 0, %s132
      %s133 = sphi 0, %s130
      %s134 = sphi 0, %s133
      %s150 = sphi 0, %s134
      %s158 = sphi 0, %s160
      %s161 = sphi 0, %s158
      %s162 = sphi 0, %s161
      %s178 = sphi 0, %s162
    $region4: #{mlp_encoder.1} parent=1 // loop_header_branch
      %17 = sbr.rel (%p15) target = $region8
    $region5: #{mlp_encoder.1} parent=1 // loop_body
      %s19 = ssub.s32 %s14, 1
      %s20 = ssub.s32 %s14, 2
      %s27 = sadd.s32 1, %s22
      %p28 = scmp.ge.s32.totalorder %s27, 1
      %s29 = scalar_select %p28, 0, %s27
      %s30 = sadd.s32 1, %s21
      %s31 = scalar_select %p28, %s30, %s21
      %p32 = scmp.ge.s32.totalorder %s31, 2
      %s33 = scalar_select %p32, 0, %s31
      %s34 = ssub.s32 %s21, %s33
      %p35 = scmp.eq.s32.totalorder %s34, 0
      %s37 = sadd.s32 %s36, 1
      %s38 = scalar_select %p35, %s36, %s37
      %p41 = pneg %p35
      %p42 = scmp.eq.s32.totalorder %s14, 1
      %p43 = por %p41, %p42
      %p44 = scmp.ne.s32.totalorder %s36, %s39
      %p45 = scmp.eq.s32.totalorder %s14, 0
      %p46 = por %p44, %p45
      %p47 = scmp.ne.s32.totalorder %s36, %s39
      %p48 = scmp.eq.s32.totalorder %s19, 1
      %p49 = por %p47, %p48
      %p50 = scmp.ne.s32.totalorder %s39, %s40
      %p51 = scmp.eq.s32.totalorder %s19, 0
      %p52 = por %p50, %p51
      %p53 = scmp.ne.s32.totalorder %s39, %s40
      %p54 = scmp.eq.s32.totalorder %s20, 1
      %p55 = por %p53, %p54
      %p57 = scmp.ne.s32.totalorder %s40, %s56
      %p58 = scmp.eq.s32.totalorder %s20, 0
      %p59 = por %p57, %p58
      %s61 = sadd.s32 %s60, 1
      %p64 = scmp.eq.s32.totalorder %s14, 1
      %p65 = scmp.ne.s32.totalorder %s60, %s62
      %p66 = scmp.eq.s32.totalorder %s14, 0
      %p67 = por %p65, %p66
      %p68 = scmp.ne.s32.totalorder %s60, %s62
      %p69 = scmp.eq.s32.totalorder %s19, 1
      %p70 = por %p68, %p69
      %p71 = scmp.ne.s32.totalorder %s62, %s63
      %p72 = scmp.eq.s32.totalorder %s19, 0
      %p73 = por %p71, %p72
      %p74 = scmp.ne.s32.totalorder %s62, %s63
      %p75 = scmp.eq.s32.totalorder %s20, 1
      %p76 = por %p74, %p75
      %p78 = scmp.ne.s32.totalorder %s63, %s77
      %p79 = scmp.eq.s32.totalorder %s20, 0
      %p80 = por %p78, %p79
      %s82 = sadd.s32 %s81, 1
      %p85 = scmp.eq.s32.totalorder %s14, 1
      %p86 = scmp.ne.s32.totalorder %s81, %s83
      %p87 = scmp.eq.s32.totalorder %s14, 0
      %p88 = por %p86, %p87
      %p89 = scmp.ne.s32.totalorder %s81, %s83
      %p90 = scmp.eq.s32.totalorder %s19, 1
      %p91 = por %p89, %p90
      %p92 = scmp.ne.s32.totalorder %s83, %s84
      %p93 = scmp.eq.s32.totalorder %s19, 0
      %p94 = por %p92, %p93
      %p95 = scmp.ne.s32.totalorder %s83, %s84
      %p96 = scmp.eq.s32.totalorder %s20, 1
      %p97 = por %p95, %p96
      %p99 = scmp.ne.s32.totalorder %s84, %s98
      %p100 = scmp.eq.s32.totalorder %s20, 0
      %p101 = por %p99, %p100
      %s102 = ssub.s32 %s22, %s29
      %p103 = scmp.eq.s32.totalorder %s102, 0
      %s105 = sadd.s32 %s104, 1
      %s106 = scalar_select %p103, %s104, %s105
      %p109 = pneg %p103
      %p110 = scmp.eq.s32.totalorder %s14, 1
      %p111 = por %p109, %p110
      %p112 = scmp.ne.s32.totalorder %s104, %s107
      %p113 = scmp.eq.s32.totalorder %s14, 0
      %p114 = por %p112, %p113
      %p115 = scmp.ne.s32.totalorder %s104, %s107
      %p116 = scmp.eq.s32.totalorder %s19, 1
      %p117 = por %p115, %p116
      %p118 = scmp.ne.s32.totalorder %s107, %s108
      %p119 = scmp.eq.s32.totalorder %s19, 0
      %p120 = por %p118, %p119
      %p121 = scmp.ne.s32.totalorder %s107, %s108
      %p122 = scmp.eq.s32.totalorder %s20, 1
      %p123 = por %p121, %p122
      %p125 = scmp.ne.s32.totalorder %s108, %s124
      %p126 = scmp.eq.s32.totalorder %s20, 0
      %p127 = por %p125, %p126
      %s128 = ssub.s32 %s22, %s29
      %p129 = scmp.eq.s32.totalorder %s128, 0
      %s131 = sadd.s32 %s130, 1
      %s132 = scalar_select %p129, %s130, %s131
      %p135 = pneg %p129
      %p136 = scmp.eq.s32.totalorder %s14, 1
      %p137 = por %p135, %p136
      %p138 = scmp.ne.s32.totalorder %s130, %s133
      %p139 = scmp.eq.s32.totalorder %s14, 0
      %p140 = por %p138, %p139
      %p141 = scmp.ne.s32.totalorder %s130, %s133
      %p142 = scmp.eq.s32.totalorder %s19, 1
      %p143 = por %p141, %p142
      %p144 = scmp.ne.s32.totalorder %s133, %s134
      %p145 = scmp.eq.s32.totalorder %s19, 0
      %p146 = por %p144, %p145
      %p147 = scmp.ne.s32.totalorder %s133, %s134
      %p148 = scmp.eq.s32.totalorder %s20, 1
      %p149 = por %p147, %p148
      %p151 = scmp.ne.s32.totalorder %s134, %s150
      %p152 = scmp.eq.s32.totalorder %s20, 0
      %p153 = por %p151, %p152
      %s154 = ssub.s32 %s21, %s33
      %s155 = ssub.s32 %s22, %s29
      %s156 = sor.u32 %s154, %s155
      %p157 = scmp.eq.s32.totalorder %s156, 0
      %s159 = sadd.s32 %s158, 1
      %s160 = scalar_select %p157, %s158, %s159
      %p163 = pneg %p157
      %p164 = scmp.eq.s32.totalorder %s14, 1
      %p165 = por %p163, %p164
      %p166 = scmp.ne.s32.totalorder %s158, %s161
      %p167 = scmp.eq.s32.totalorder %s14, 0
      %p168 = por %p166, %p167
      %p169 = scmp.ne.s32.totalorder %s158, %s161
      %p170 = scmp.eq.s32.totalorder %s19, 1
      %p171 = por %p169, %p170
      %p172 = scmp.ne.s32.totalorder %s161, %s162
      %p173 = scmp.eq.s32.totalorder %s19, 0
      %p174 = por %p172, %p173
      %p175 = scmp.ne.s32.totalorder %s161, %s162
      %p176 = scmp.eq.s32.totalorder %s20, 1
      %p177 = por %p175, %p176
      %p179 = scmp.ne.s32.totalorder %s162, %s178
      %p180 = scmp.eq.s32.totalorder %s20, 0
      %p181 = por %p179, %p180
      %p182 = scmp.le.s32.totalorder 1, %s14
      %p183 = scmp.lt.s32.totalorder %s14, 3
      %p184 = pnand %p182, %p183
      %p185 = pneg %p184
      // Predicated region
      $region9: #{mlp_encoder.1} parent=5 // pred_check
        _
      $region10: #{mlp_encoder.1} parent=5 // pred_check_branch
        %187 = sbr.rel (%p184) target = $region12
      $region11: #{mlp_encoder.1} parent=5 // pred_region
        %s188 = ssub.s32 %s14, 1
        // Predicated region
        $region13: #{mlp_encoder.1} parent=11 // pred_check
          %p189 = pneg %p73
        $region14: #{mlp_encoder.1} parent=11 // pred_check_branch
          %191 = sbr.rel (%p189) target = $region16
        $region15: #{mlp_encoder.1} parent=11 // pred_region
          _
        $region16: #{mlp_encoder.1} parent=11 // pred_fallthru
          _
        // Predicated region
        $region17: #{mlp_encoder.1} parent=11 // pred_check
          %p192 = pneg %p94
        $region18: #{mlp_encoder.1} parent=11 // pred_check_branch
          %194 = sbr.rel (%p192) target = $region20
        $region19: #{mlp_encoder.1} parent=11 // pred_region
          _
        $region20: #{mlp_encoder.1} parent=11 // pred_fallthru
          _
        // Predicated region
        $region21: #{mlp_encoder.1} parent=11 // pred_check
          %p195 = pneg %p120
        $region22: #{mlp_encoder.1} parent=11 // pred_check_branch
          %197 = sbr.rel (%p195) target = $region24
        $region23: #{mlp_encoder.1} parent=11 // pred_region
          %s198 = smul.u32 2, %s24
          %p199 = scmp.lt.s32.totalorder %s198, 1
          %s200 = scalar_select %p199, %s198, 1
          %s201 = smul.addr %s200, 4
          %s202 = scalar_lea.vmem %s3, %s201
          %s203 = smul.u32 2, %s24
        $region24: #{mlp_encoder.1} parent=11 // pred_fallthru
          _
        // Predicated region
        $region25: #{mlp_encoder.1} parent=11 // pred_check
          %p204 = pneg %p146
        $region26: #{mlp_encoder.1} parent=11 // pred_check_branch
          %206 = sbr.rel (%p204) target = $region28
        $region27: #{mlp_encoder.1} parent=11 // pred_region
          %s207 = smul.u32 2, %s24
          %p208 = scmp.lt.s32.totalorder %s207, 1
          %s209 = scalar_select %p208, %s207, 1
          %s210 = scalar_lea.vmem %s4, %s209
          %s211 = smul.u32 2, %s24
        $region28: #{mlp_encoder.1} parent=11 // pred_fallthru
          _
      $region12: #{mlp_encoder.1} parent=5 // pred_fallthru
        _
      %p212 = scmp.lt.s32.totalorder %s14, 2
      // Predicated region
      $region29: #{mlp_encoder.1} parent=5 // pred_check
        %p213 = pneg %p212
      $region30: #{mlp_encoder.1} parent=5 // pred_check_branch
        %215 = sbr.rel (%p213) target = $region32
      $region31: #{mlp_encoder.1} parent=5 // pred_region
        // Predicated region
        $region33: #{mlp_encoder.1} parent=31 // pred_check
          %p216 = pneg %p46
        $region34: #{mlp_encoder.1} parent=31 // pred_check_branch
          %218 = sbr.rel (%p216) target = $region36
        $region35: #{mlp_encoder.1} parent=31 // pred_region
          %p219 = scmp.lt.s32.totalorder %s21, 1
          %s220 = scalar_select %p219, %s21, 1
          %s221 = smul.addr %s220, 4
          %s222 = scalar_lea.vmem %s0, %s221
        $region36: #{mlp_encoder.1} parent=31 // pred_fallthru
          _
      $region32: #{mlp_encoder.1} parent=5 // pred_fallthru
        _
      %p223 = scmp.le.s32.totalorder 1, %s14
      %p224 = scmp.lt.s32.totalorder %s14, 3
      %p225 = pnand %p223, %p224
      %p226 = pneg %p225
      // Predicated region
      $region37: #{mlp_encoder.1} parent=5 // pred_check
        _
      $region38: #{mlp_encoder.1} parent=5 // pred_check_branch
        %228 = sbr.rel (%p225) target = $region40
      $region39: #{mlp_encoder.1} parent=5 // pred_region
        %s229 = ssub.s32 %s14, 1
        %p230 = scmp.lt.s32.totalorder %s23, 1
        %s231 = scalar_select %p230, %s23, 1
        %s232 = smul.addr %s231, 4
        %s233 = scalar_lea.vmem %s0, %s232
        %p234 = pneg %p52
        %p235 = pneg %p49
        %p236 = pneg %p73
        %p237 = pneg %p70
        %p238 = pneg %p94
        %p239 = pneg %p91
        %s240 = smul.u32 2, %s24
        %p241 = scmp.lt.s32.totalorder %s240, 1
        %s242 = scalar_select %p241, %s240, 1
        %s243 = smul.addr %s242, 4
        %s244 = scalar_lea.vmem %s3, %s243
        %p245 = pneg %p120
        %p246 = pneg %p117
        %s247 = smul.u32 2, %s24
        %p248 = scmp.lt.s32.totalorder %s247, 1
        %s249 = scalar_select %p248, %s247, 1
        %s250 = scalar_lea.vmem %s4, %s249
        %p251 = pneg %p146
        %p252 = pneg %p143
        %p253 = pneg %p174
        %p254 = pneg %p171
        %s255 = sand.u32 %s161, 1
        %s256 = scalar_lea.sflag [#allocation4], %s255
        %s257 = sand.u32 %s161, 1
        %s258 = smul.addr %s257, 16
        %s259 = scalar_lea.vmem [#allocation3], %s258
        %p260 = scmp.lt.s32.totalorder %s23, 1
        %s261 = scalar_select %p260, %s23, 1
        %s262 = smul.addr %s261, 4
        %s263 = scalar_lea.vmem %s0, %s262
        %s264 = smul.u32 2, %s24
        %p265 = scmp.lt.s32.totalorder %s264, 1
        %s266 = scalar_select %p265, %s264, 1
        %s267 = smul.addr %s266, 4
        %s268 = scalar_lea.vmem %s3, %s267
        %s269 = smul.u32 2, %s24
        %s270 = smul.u32 2, %s24
        %p271 = scmp.lt.s32.totalorder %s270, 1
        %s272 = scalar_select %p271, %s270, 1
        %s273 = scalar_lea.vmem %s4, %s272
        %s274 = smul.u32 2, %s24
        %s275 = smul.u32 2, %s24
        %p277 = scmp.eq.s32.totalorder %s24, 0
        // Predicated region
        $region41: #{mlp_encoder.1} parent=39 // pred_check
          %p278 = pneg %p277
        $region42: #{mlp_encoder.1} parent=39 // pred_check_branch
          %280 = sbr.rel (%p278) target = $region44
        $region43: #{mlp_encoder.1} parent=39 // pred_region
          %v281 = vld [vmem:[%s263] sm:$0xf]
          %v282 = vld [vmem:[%s1] sm:$0xff]
          %v283 = vld [vmem:[%s1 + $0x8] sm:$0xff]
          %v284 = vld [vmem:[%s1 + $0x10] sm:$0xff]
          %v285 = vld [vmem:[%s1 + $0x18] sm:$0xff]
          %v286 = vld [vmem:[%s1 + $0x20] sm:$0xff]
          %v287 = vld [vmem:[%s1 + $0x28] sm:$0xff]
          %v288 = vld [vmem:[%s1 + $0x30] sm:$0xff]
          %v289 = vld [vmem:[%s1 + $0x38] sm:$0xff]
          %v290 = vld [vmem:[%s1 + $0x40] sm:$0xff]
          %v291 = vld [vmem:[%s1 + $0x48] sm:$0xff]
          %v292 = vld [vmem:[%s1 + $0x50] sm:$0xff]
          %v293 = vld [vmem:[%s1 + $0x58] sm:$0xff]
          %v294 = vld [vmem:[%s1 + $0x60] sm:$0xff]
          %v295 = vld [vmem:[%s1 + $0x68] sm:$0xff]
          %v296 = vld [vmem:[%s1 + $0x70] sm:$0xff]
          %v297 = vld [vmem:[%s1 + $0x78] sm:$0xff]
          %v298 = vld [vmem:[%s2] sm:$0x3]
          %v300 = vlaneseq
          %v301 = vshrl.u32 %v300, 7
          %v302 = vsub.s32 0, %v301
          %v303 = vrot.slane %v298, %v302
          %v304 = vlaneseq
          %v305 = vshrl.u32 %v304, 7
          %v306 = vsub.s32 1, %v305
          %v307 = vrot.slane %v298, %v306
          %v326 = vunpack.c.l.b16 %v282
          %v327 = vunpack.c.h.b16 %v282
          %v328 = vunpack.c.l.b16 %v283
          %v329 = vunpack.c.h.b16 %v283
          %v330 = vunpack.c.l.b16 %v284
          %v331 = vunpack.c.h.b16 %v284
          %v332 = vunpack.c.l.b16 %v285
          %v333 = vunpack.c.h.b16 %v285
          %v334 = vunpack.c.l.b16 %v286
          %v335 = vunpack.c.h.b16 %v286
          %v336 = vunpack.c.l.b16 %v287
          %v337 = vunpack.c.h.b16 %v287
          %v338 = vunpack.c.l.b16 %v288
          %v339 = vunpack.c.h.b16 %v288
          %v340 = vunpack.c.l.b16 %v289
          %v341 = vunpack.c.h.b16 %v289
          %v342 = vunpack.c.l.b16 %v290
          %v343 = vunpack.c.h.b16 %v290
          %v344 = vunpack.c.l.b16 %v291
          %v345 = vunpack.c.h.b16 %v291
          %v346 = vunpack.c.l.b16 %v292
          %v347 = vunpack.c.h.b16 %v292
          %v348 = vunpack.c.l.b16 %v293
          %v349 = vunpack.c.h.b16 %v293
          %v350 = vunpack.c.l.b16 %v294
          %v351 = vunpack.c.h.b16 %v294
          %v352 = vunpack.c.l.b16 %v295
          %v353 = vunpack.c.h.b16 %v295
          %v354 = vunpack.c.l.b16 %v296
          %v355 = vunpack.c.h.b16 %v296
          %v356 = vunpack.c.l.b16 %v297
          %v357 = vunpack.c.h.b16 %v297
          %v358 = vpack.c.b16 %v328, %v326
          %v359 = vpack.c.b16 %v329, %v327
          %v360 = vpack.c.b16 %v332, %v330
          %v361 = vpack.c.b16 %v333, %v331
          %v362 = vpack.c.b16 %v336, %v334
          %v363 = vpack.c.b16 %v337, %v335
          %v364 = vpack.c.b16 %v340, %v338
          %v365 = vpack.c.b16 %v341, %v339
          %v366 = vpack.c.b16 %v344, %v342
          %v367 = vpack.c.b16 %v345, %v343
          %v368 = vpack.c.b16 %v348, %v346
          %v369 = vpack.c.b16 %v349, %v347
          %v370 = vpack.c.b16 %v352, %v350
          %v371 = vpack.c.b16 %v353, %v351
          %v372 = vpack.c.b16 %v356, %v354
          %v373 = vpack.c.b16 %v357, %v355
          %390 = vmatprep.subr.bf16.mxu0 %v359
          %391 = vmatpush1.bf16.msra.mxu0 %v358
          %392 = vmatprep.subr.bf16.mxu0 %v361
          %393 = vmatpush1.bf16.msra.mxu0 %v360
          %394 = vmatprep.subr.bf16.mxu0 %v363
          %395 = vmatpush1.bf16.msra.mxu0 %v362
          %396 = vmatprep.subr.bf16.mxu0 %v365
          %397 = vmatpush1.bf16.msra.mxu0 %v364
          %398 = vmatprep.subr.bf16.mxu0 %v367
          %399 = vmatpush1.bf16.msra.mxu0 %v366
          %400 = vmatprep.subr.bf16.mxu0 %v369
          %401 = vmatpush1.bf16.msra.mxu0 %v368
          %402 = vmatprep.subr.bf16.mxu0 %v371
          %403 = vmatpush1.bf16.msra.mxu0 %v370
          %404 = vmatprep.subr.bf16.mxu0 %v373
          %405 = vmatpush1.bf16.msra.mxu0 %v372
          %406 = vmatprep.subr.bf16.mxu0 0
          %407 = vmatpush1.bf16.msra.mxu0 0
          %408 = vmatprep.subr.bf16.mxu0 0
          %409 = vmatpush1.bf16.msra.mxu0 0
          %410 = vmatprep.subr.bf16.mxu0 0
          %411 = vmatpush1.bf16.msra.mxu0 0
          %412 = vmatprep.subr.bf16.mxu0 0
          %413 = vmatpush1.bf16.msra.mxu0 0
          %414 = vmatprep.subr.bf16.mxu0 0
          %415 = vmatpush1.bf16.msra.mxu0 0
          %416 = vmatprep.subr.bf16.mxu0 0
          %417 = vmatpush1.bf16.msra.mxu0 0
          %418 = vmatprep.subr.bf16.mxu0 0
          %419 = vmatpush1.bf16.msra.mxu0 0
          %420 = vmatprep.subr.bf16.mxu0 0
          %421 = vmatpush1.bf16.msra.mxu0 0
          %422 = vmatprep.mubr.bf16.mxu0 0
          %423 = vmatmul.mubr.bf16.gmra.mrb[0].mxu0 %v281
          %v424 = vpop.f32.mrb[0].mxu0
          %v425 = vadd.f32 %v303, %v424
          %v426 = vpop.f32.mrb[0].mxu0
          %v427 = vadd.f32 %v307, %v426
          %v428 = vpop.f32.mrb[0].mxu0
          %v429 = vpop.f32.mrb[0].mxu0
          %430 = vdwg.mxu0
          %v431 = vmax.f32 %v425, 0.0
          %v432 = vmax.f32 %v427, 0.0
          %v433 = vpack.c.bf16 %v431, %v431
          %v434 = vpack.c.bf16 %v432, %v432
          %v437 = vunpack.c.l.b16 %v433
          %v438 = vunpack.c.l.b16 %v434
          %v439 = vpack.c.b16 %v438, %v437
          %441 = vst [vmem:[#allocation2] sm:$0xff] %v439
        $region44: #{mlp_encoder.1} parent=39 // pred_fallthru
          _
        %v442 = vld [vmem:[#allocation2] sm:$0xff]
        %v443 = vld [vmem:[%s268] sm:$0xff]
        %v444 = vld [vmem:[%s268 + $0x8] sm:$0xff]
        %v445 = vld [vmem:[%s268 + $0x10] sm:$0xff]
        %v446 = vld [vmem:[%s268 + $0x18] sm:$0xff]
        %v447 = vld [vmem:[%s268 + $0x20] sm:$0xff]
        %v448 = vld [vmem:[%s268 + $0x28] sm:$0xff]
        %v449 = vld [vmem:[%s268 + $0x30] sm:$0xff]
        %v450 = vld [vmem:[%s268 + $0x38] sm:$0xff]
        %v451 = vld [vmem:[%s268 + $0x40] sm:$0xff]
        %v452 = vld [vmem:[%s268 + $0x48] sm:$0xff]
        %v453 = vld [vmem:[%s268 + $0x50] sm:$0xff]
        %v454 = vld [vmem:[%s268 + $0x58] sm:$0xff]
        %v455 = vld [vmem:[%s268 + $0x60] sm:$0xff]
        %v456 = vld [vmem:[%s268 + $0x68] sm:$0xff]
        %v457 = vld [vmem:[%s268 + $0x70] sm:$0xff]
        %v458 = vld [vmem:[%s268 + $0x78] sm:$0xff]
        %v459 = vld [vmem:[%s268 + $0x80] sm:$0xff]
        %v460 = vld [vmem:[%s268 + $0x88] sm:$0xff]
        %v461 = vld [vmem:[%s268 + $0x90] sm:$0xff]
        %v462 = vld [vmem:[%s268 + $0x98] sm:$0xff]
        %v463 = vld [vmem:[%s268 + $0xa0] sm:$0xff]
        %v464 = vld [vmem:[%s268 + $0xa8] sm:$0xff]
        %v465 = vld [vmem:[%s268 + $0xb0] sm:$0xff]
        %v466 = vld [vmem:[%s268 + $0xb8] sm:$0xff]
        %v467 = vld [vmem:[%s268 + $0xc0] sm:$0xff]
        %v468 = vld [vmem:[%s268 + $0xc8] sm:$0xff]
        %v469 = vld [vmem:[%s268 + $0xd0] sm:$0xff]
        %v470 = vld [vmem:[%s268 + $0xd8] sm:$0xff]
        %v471 = vld [vmem:[%s268 + $0xe0] sm:$0xff]
        %v472 = vld [vmem:[%s268 + $0xe8] sm:$0xff]
        %v473 = vld [vmem:[%s268 + $0xf0] sm:$0xff]
        %v474 = vld [vmem:[%s268 + $0xf8] sm:$0xff]
        %v475 = vld [vmem:[%s273] sm:$0x3]
        %v477 = vlaneseq
        %v478 = vshrl.u32 %v477, 7
        %v479 = vsub.s32 0, %v478
        %v480 = vrot.slane %v475, %v479
        %v481 = vlaneseq
        %v482 = vshrl.u32 %v481, 7
        %v483 = vsub.s32 1, %v482
        %v484 = vrot.slane %v475, %v483
        %v488 = vunpack.c.l.b16 %v442
        %v489 = vunpack.c.h.b16 %v442
        %v490 = vpack.c.b16 %v488, %v488
        %v491 = vpack.c.b16 %v489, %v489
        %v526 = vunpack.c.l.b16 %v443
        %v527 = vunpack.c.h.b16 %v443
        %v528 = vunpack.c.l.b16 %v444
        %v529 = vunpack.c.h.b16 %v444
        %v530 = vunpack.c.l.b16 %v445
        %v531 = vunpack.c.h.b16 %v445
        %v532 = vunpack.c.l.b16 %v446
        %v533 = vunpack.c.h.b16 %v446
        %v534 = vunpack.c.l.b16 %v447
        %v535 = vunpack.c.h.b16 %v447
        %v536 = vunpack.c.l.b16 %v448
        %v537 = vunpack.c.h.b16 %v448
        %v538 = vunpack.c.l.b16 %v449
        %v539 = vunpack.c.h.b16 %v449
        %v540 = vunpack.c.l.b16 %v450
        %v541 = vunpack.c.h.b16 %v450
        %v542 = vunpack.c.l.b16 %v451
        %v543 = vunpack.c.h.b16 %v451
        %v544 = vunpack.c.l.b16 %v452
        %v545 = vunpack.c.h.b16 %v452
        %v546 = vunpack.c.l.b16 %v453
        %v547 = vunpack.c.h.b16 %v453
        %v548 = vunpack.c.l.b16 %v454
        %v549 = vunpack.c.h.b16 %v454
        %v550 = vunpack.c.l.b16 %v455
        %v551 = vunpack.c.h.b16 %v455
        %v552 = vunpack.c.l.b16 %v456
        %v553 = vunpack.c.h.b16 %v456
        %v554 = vunpack.c.l.b16 %v457
        %v555 = vunpack.c.h.b16 %v457
        %v556 = vunpack.c.l.b16 %v458
        %v557 = vunpack.c.h.b16 %v458
        %v558 = vunpack.c.l.b16 %v459
        %v559 = vunpack.c.h.b16 %v459
        %v560 = vunpack.c.l.b16 %v460
        %v561 = vunpack.c.h.b16 %v460
        %v562 = vunpack.c.l.b16 %v461
        %v563 = vunpack.c.h.b16 %v461
        %v564 = vunpack.c.l.b16 %v462
        %v565 = vunpack.c.h.b16 %v462
        %v566 = vunpack.c.l.b16 %v463
        %v567 = vunpack.c.h.b16 %v463
        %v568 = vunpack.c.l.b16 %v464
        %v569 = vunpack.c.h.b16 %v464
        %v570 = vunpack.c.l.b16 %v465
        %v571 = vunpack.c.h.b16 %v465
        %v572 = vunpack.c.l.b16 %v466
        %v573 = vunpack.c.h.b16 %v466
        %v574 = vunpack.c.l.b16 %v467
        %v575 = vunpack.c.h.b16 %v467
        %v576 = vunpack.c.l.b16 %v468
        %v577 = vunpack.c.h.b16 %v468
        %v578 = vunpack.c.l.b16 %v469
        %v579 = vunpack.c.h.b16 %v469
        %v580 = vunpack.c.l.b16 %v470
        %v581 = vunpack.c.h.b16 %v470
        %v582 = vunpack.c.l.b16 %v471
        %v583 = vunpack.c.h.b16 %v471
        %v584 = vunpack.c.l.b16 %v472
        %v585 = vunpack.c.h.b16 %v472
        %v586 = vunpack.c.l.b16 %v473
        %v587 = vunpack.c.h.b16 %v473
        %v588 = vunpack.c.l.b16 %v474
        %v589 = vunpack.c.h.b16 %v474
        %v590 = vpack.c.b16 %v528, %v526
        %v591 = vpack.c.b16 %v529, %v527
        %v592 = vpack.c.b16 %v532, %v530
        %v593 = vpack.c.b16 %v533, %v531
        %v594 = vpack.c.b16 %v536, %v534
        %v595 = vpack.c.b16 %v537, %v535
        %v596 = vpack.c.b16 %v540, %v538
        %v597 = vpack.c.b16 %v541, %v539
        %v598 = vpack.c.b16 %v544, %v542
        %v599 = vpack.c.b16 %v545, %v543
        %v600 = vpack.c.b16 %v548, %v546
        %v601 = vpack.c.b16 %v549, %v547
        %v602 = vpack.c.b16 %v552, %v550
        %v603 = vpack.c.b16 %v553, %v551
        %v604 = vpack.c.b16 %v556, %v554
        %v605 = vpack.c.b16 %v557, %v555
        %v606 = vpack.c.b16 %v560, %v558
        %v607 = vpack.c.b16 %v561, %v559
        %v608 = vpack.c.b16 %v564, %v562
        %v609 = vpack.c.b16 %v565, %v563
        %v610 = vpack.c.b16 %v568, %v566
        %v611 = vpack.c.b16 %v569, %v567
        %v612 = vpack.c.b16 %v572, %v570
        %v613 = vpack.c.b16 %v573, %v571
        %v614 = vpack.c.b16 %v576, %v574
        %v615 = vpack.c.b16 %v577, %v575
        %v616 = vpack.c.b16 %v580, %v578
        %v617 = vpack.c.b16 %v581, %v579
        %v618 = vpack.c.b16 %v584, %v582
        %v619 = vpack.c.b16 %v585, %v583
        %v620 = vpack.c.b16 %v588, %v586
        %v621 = vpack.c.b16 %v589, %v587
        %654 = vmatprep.subr.bf16.mxu0 %v591
        %655 = vmatpush1.bf16.msra.mxu0 %v590
        %656 = vmatprep.subr.bf16.mxu0 %v593
        %657 = vmatpush1.bf16.msra.mxu0 %v592
        %658 = vmatprep.subr.bf16.mxu0 %v595
        %659 = vmatpush1.bf16.msra.mxu0 %v594
        %660 = vmatprep.subr.bf16.mxu0 %v597
        %661 = vmatpush1.bf16.msra.mxu0 %v596
        %662 = vmatprep.subr.bf16.mxu0 %v599
        %663 = vmatpush1.bf16.msra.mxu0 %v598
        %664 = vmatprep.subr.bf16.mxu0 %v601
        %665 = vmatpush1.bf16.msra.mxu0 %v600
        %666 = vmatprep.subr.bf16.mxu0 %v603
        %667 = vmatpush1.bf16.msra.mxu0 %v602
        %668 = vmatprep.subr.bf16.mxu0 %v605
        %669 = vmatpush1.bf16.msra.mxu0 %v604
        %670 = vmatprep.subr.bf16.mxu0 %v607
        %671 = vmatpush1.bf16.msra.mxu0 %v606
        %672 = vmatprep.subr.bf16.mxu0 %v609
        %673 = vmatpush1.bf16.msra.mxu0 %v608
        %674 = vmatprep.subr.bf16.mxu0 %v611
        %675 = vmatpush1.bf16.msra.mxu0 %v610
        %676 = vmatprep.subr.bf16.mxu0 %v613
        %677 = vmatpush1.bf16.msra.mxu0 %v612
        %678 = vmatprep.subr.bf16.mxu0 %v615
        %679 = vmatpush1.bf16.msra.mxu0 %v614
        %680 = vmatprep.subr.bf16.mxu0 %v617
        %681 = vmatpush1.bf16.msra.mxu0 %v616
        %682 = vmatprep.subr.bf16.mxu0 %v619
        %683 = vmatpush1.bf16.msra.mxu0 %v618
        %684 = vmatprep.subr.bf16.mxu0 %v621
        %685 = vmatpush1.bf16.msra.mxu0 %v620
        %686 = vmatprep.mubr.bf16.mxu0 %v491
        %687 = vmatmul.mubr.bf16.gmra.mrb[0].mxu0 %v490
        %v688 = vpop.f32.mrb[0].mxu0
        %v689 = vadd.f32 %v480, %v688
        %v690 = vpop.f32.mrb[0].mxu0
        %v691 = vadd.f32 %v484, %v690
        %v692 = vpop.f32.mrb[0].mxu0
        %v693 = vpop.f32.mrb[0].mxu0
        %694 = vdwg.mxu0
        %695 = vst [vmem:[%s259] sm:$0xff] %v689
        %696 = vst [vmem:[%s259 + $0x8] sm:$0xff] %v691
        %s697 = sand.u32 %s161, 1
        %s698 = scalar_lea.sflag [#allocation4], %s697
        %s699 = sand.u32 %s161, 1
        %s700 = smul.addr %s699, 16
        %s701 = scalar_lea.vmem [#allocation3], %s700
        // Predicated region
        $region45: #{mlp_encoder.1} parent=39 // pred_check
          %p702 = pneg %p171
        $region46: #{mlp_encoder.1} parent=39 // pred_check_branch
          %704 = sbr.rel (%p702) target = $region48
        $region47: #{mlp_encoder.1} parent=39 // pred_region
          %s705 = smul.u32 2, %s24
          %s707 = ssub.s32 256, 256
          %708 = vsyncadd %s698, %s707
          %s709 = smul.addr %s23, 2
          %s710 = sadd.s32 %s705, %s709
          %s711 = smul.addr %s710, 128
          %s712 = scalar_lea.hbm %s5, %s711
          %s714 = sshll.u32 %s701, 4
          %s715 = int_to_ptr.vmem [resolvable:$true] %s714
          %717 = dma.vmem_to_hbm [thread:$0]  %s715, 256, %s712, %s698
        $region48: #{mlp_encoder.1} parent=39 // pred_fallthru
          _
      $region40: #{mlp_encoder.1} parent=5 // pred_fallthru
        _
      %p718 = scmp.le.s32.totalorder 2, %s14
      // Predicated region
      $region49: #{mlp_encoder.1} parent=5 // pred_check
        %p719 = pneg %p718
      $region50: #{mlp_encoder.1} parent=5 // pred_check_branch
        %721 = sbr.rel (%p719) target = $region52
      $region51: #{mlp_encoder.1} parent=5 // pred_region
        %s722 = ssub.s32 %s14, 2
        // Predicated region
        $region53: #{mlp_encoder.1} parent=51 // pred_check
          %p723 = pneg %p177
        $region54: #{mlp_encoder.1} parent=51 // pred_check_branch
          %725 = sbr.rel (%p723) target = $region56
        $region55: #{mlp_encoder.1} parent=51 // pred_region
          %s726 = sand.u32 %s162, 1
          %s727 = scalar_lea.sflag [#allocation4], %s726
          %s728 = sand.u32 %s162, 1
          %s729 = smul.addr %s728, 16
          %s730 = scalar_lea.vmem [#allocation3], %s729
          %731 = dma.done %s727, 256
        $region56: #{mlp_encoder.1} parent=51 // pred_fallthru
          _
      $region52: #{mlp_encoder.1} parent=5 // pred_fallthru
        _
    $region6: #{mlp_encoder.1} parent=1 // loop_footer
      %s18 = sadd.s32 1, %s14
    $region7: #{mlp_encoder.1} parent=1 // loop_footer_branch
      %13 = sbr.rel target = $region3
    $region8: #{mlp_encoder.1} parent=1 // loop_exit
      _
    %732 = vsyncpa [#allocation4], 1
    %s733 = scalar_lea.sflag [#allocation4], 1
    %734 = vsyncpa %s733, 1

</llo_original>
